<compile_context>
chip_gen: v7x
topology: tpu7x:2x2x1
jax: 0.10.0
libtpu: 0.0.40
codegen_flags: <defaults>
</compile_context>

<pallas_src>
import jax
import jax.numpy as jnp
from jax.experimental import pallas as pl
from jax.experimental.pallas import tpu as pltpu


def _chomp_kernel(x_ref, o_ref):
    # Identical block geometry on both sides: pure tile copy.
    o_ref[...] = x_ref[...]


def _round_up(v: int, m: int) -> int:
    return ((v + m - 1) // m) * m


def _round_down(v: int, m: int) -> int:
    return (v // m) * m


def _block_budget_bytes() -> int:
    # ~4 MiB blocks are a good compromise for v7x (64 MiB VMEM, 3.2 TB/s);
    # bump to ~8 MiB on chips with >=96 MiB VMEM (v5e/v6e) to further
    # amortize per-grid-step overhead.
    budget = 4 * 1024 * 1024
    try:
        info = pltpu.get_tpu_info()
        vmem_cap = getattr(info, "vmem_capacity_bytes", 0)
        if vmem_cap and vmem_cap >= 96 * 1024 * 1024:
            budget = 8 * 1024 * 1024
    except Exception:
        pass
    return budget


def _select_tiles(rows: int, l_out: int, dtype_bytes: int, budget: int):
    """Pick (tr, tl): lane tile first (contiguous DMA), then row tile to fit."""
    # dtype-aware sublane packing: 8 for f32, 16 for bf16, 32 for int8/fp8.
    sublane = max(8, 32 // dtype_bytes)
    tl_full = _round_up(l_out, 128)
    min_tr = rows if rows < sublane else sublane

    if tl_full * min_tr * dtype_bytes <= budget:
        # Full-width lane tile fits: output DMA fully contiguous.
        tl = tl_full
        tr_budget = budget // (tl * dtype_bytes)
        if rows < sublane:
            tr = rows  # full dim -> always legal even if not a multiple of 8
        else:
            tr = _round_down(min(tr_budget, _round_up(rows, sublane)), sublane)
            tr = max(tr, sublane)
    else:
        # L_out too long for one block even with the minimal row tile: split L.
        tr = min_tr
        tl = _round_down(budget // (max(tr, 1) * dtype_bytes), 128)
        tl = max(128, min(tl, tl_full))

    # v7x megacore: make sure there are >=2 blocks along a parallel axis so the
    # grid can shard across the two TensorCores (skip if the array is tiny).
    if pl.cdiv(rows, tr) == 1 and pl.cdiv(l_out, tl) == 1:
        if rows >= 2 * sublane:
            tr = _round_up((rows + 1) // 2, sublane)
        elif tl >= 256:
            tl = _round_up((l_out + 1) // 2, 128)
    return tr, tl


def chomp1d(x: jax.Array, chomp_size: int) -> jax.Array:
    """x: (N, C, L) -> (N, C, L - chomp_size). Matches x[:, :, :-chomp_size].

    Note: chomp_size must be > 0 (PyTorch's x[:, :, :-0] returns an empty
    tensor; we reject that case explicitly).
    """
    assert chomp_size > 0, "chomp_size must be positive"
    n, c, l = x.shape
    l_out = l - chomp_size
    assert l_out > 0, "chomp_size must be smaller than the temporal length"

    dtype_bytes = jnp.dtype(x.dtype).itemsize
    rows = n * c

    # Collapse (N, C) -> rows: free reshape (last dim unchanged), gives
    # sublane-dense blocks and fewer grid steps when C is small.
    x2 = x.reshape(rows, l)

    budget = _block_budget_bytes()
    tr, tl = _select_tiles(rows, l_out, dtype_bytes, budget)

    grid = (pl.cdiv(rows, tr), pl.cdiv(l_out, tl))
    block = (tr, tl)
    index_map = lambda ri, li: (ri, li)

    block_bytes = tr * tl * dtype_bytes
    # 2 buffers x (in + out) x block_bytes, plus headroom; keep well under the
    # 64 MiB physical VMEM of v7x.
    vmem_limit = min(48 * 1024 * 1024, max(32 * 1024 * 1024, 4 * block_bytes + (8 << 20)))

    out2 = pl.pallas_call(
        _chomp_kernel,
        out_shape=jax.ShapeDtypeStruct((rows, l_out), x.dtype),
        grid_spec=pltpu.PrefetchScalarGridSpec(
            num_scalar_prefetch=0,
            grid=grid,
            in_specs=[pl.BlockSpec(block, index_map)],
            out_specs=pl.BlockSpec(block, index_map),
        ),
        compiler_params=pltpu.CompilerParams(
            dimension_semantics=("parallel", "parallel"),
            vmem_limit_bytes=vmem_limit,
        ),
        cost_estimate=pl.CostEstimate(
            flops=0,
            transcendentals=0,
            bytes_accessed=2 * rows * l_out * dtype_bytes,
        ),
    )(x2)

    return out2.reshape(n, c, l_out)


if __name__ == "__main__":
    key = jax.random.PRNGKey(0)

    # Small shape matching the module's expected (N, C, L) layout.
    N, C, L = 2, 4, 16
    chomp_size = 3
    x = jax.random.normal(key, (N, C, L), dtype=jnp.float32)

    out = chomp1d(x, chomp_size)
    out = jax.block_until_ready(out)

    ref = x[:, :, :-chomp_size]
    assert out.shape == (N, C, L - chomp_size), out.shape
    assert out.dtype == x.dtype
    assert jnp.array_equal(out, ref), "mismatch vs reference slice"

    # Second case: multiple row tiles (megacore split) + masked partial L block.
    key2 = jax.random.PRNGKey(1)
    x2 = jax.random.normal(key2, (2, 16, 300), dtype=jnp.float32)
    out2 = jax.block_until_ready(chomp1d(x2, 4))
    assert jnp.array_equal(out2, x2[:, :, :-4]), "mismatch vs reference slice (tiled case)"

    # Third case: bf16 with small/odd channel count (full-dim row tile path).
    key3 = jax.random.PRNGKey(2)
    x3 = jax.random.normal(key3, (1, 3, 130), dtype=jnp.bfloat16)
    out3 = jax.block_until_ready(chomp1d(x3, 2))
    assert jnp.array_equal(out3, x3[:, :, :-2]), "mismatch vs reference slice (bf16 case)"

    print("KERNEL_OK")
</pallas_src>

<mosaic_0001>
module attributes {stable_mosaic.version = 11 : i64} {
  func.func @_chomp_kernel(%arg0: i32, %arg1: i32, %arg2: memref<8x128xf32, #tpu.memory_space<vmem>>, %arg3: memref<8x128xf32, #tpu.memory_space<vmem>>) attributes {dimension_semantics = [#tpu.dimension_semantics<parallel>, #tpu.dimension_semantics<parallel>], iteration_bounds = array<i64: 1, 1>, scalar_prefetch = 0 : i64, scratch_operands = 0 : i64, tpu.core_type = #tpu.core_type<tc>, window_params = [{transform_indices = @transform_0, window_bounds = array<i64: 8, 128>}, {transform_indices = @transform_1, window_bounds = array<i64: 8, 128>}]} {
    %c0 = arith.constant 0 : index
    %c0_0 = arith.constant 0 : index
    %0 = vector.load %arg2[%c0, %c0_0] : memref<8x128xf32, #tpu.memory_space<vmem>>, vector<8x128xf32>
    %c0_1 = arith.constant 0 : index
    %c0_2 = arith.constant 0 : index
    %1 = vector.load %arg3[%c0_1, %c0_2] : memref<8x128xf32, #tpu.memory_space<vmem>>, vector<8x128xf32>
    tpu.vector_store %arg3[%c0_1, %c0_2], %0 {strides = array<i32>} : memref<8x128xf32, #tpu.memory_space<vmem>>, vector<8x128xf32>,
    return
  }
  func.func @transform_0(%arg0: i32, %arg1: i32) -> (i32, i32) {
    %c0_i32 = arith.constant 0 : i32
    return %arg0, %arg1 : i32, i32
  }
  func.func @transform_1(%arg0: i32, %arg1: i32) -> (i32, i32) {
    %c0_i32 = arith.constant 0 : i32
    return %arg0, %arg1 : i32, i32
  }
}

</mosaic_0001>

<llo_original>
// kernel: tpu_custom_call.1
$region0: #{tpu_custom_call.1}
  #allocation0 [shape = 'u32[]', space=smem, size = 0x4, offset = 0x4, fixed_abs, tag = 'smem constant byte address 0x4 - core index']
  #allocation1 [shape = 'u32[144,128]{1,0:T(1,128)}', space=vmem, size = 0x12000, scoped, tag = 'internal scratch']
  %s0 = inlined_call_operand.hbm [shape: f32[8,16], index: 0, kind: input, shape index: {}]
  %s1 = inlined_call_operand.hbm [shape: f32[8,13], index: 1, kind: output, shape index: {}]
  %s2 = sld [smem:[#allocation0]]
  $region18: #{tpu_custom_call.1} parent=0
    _
  %s4 = ssub.s32 1, %s2
  %s5 = scalar_select 0, %s4, %s2
  $region1: #{tpu_custom_call.1} parent=0
    #allocation2 [shape = 'u8[4096]{0}', space=vmem, size = 0x1000, scoped, tag = 'input window, operand 0, single buffered']
    #allocation3 [shape = 's32[1]{0}', space=sflag, size = 0x4, scoped, tag = 'scoped memory for tpu_custom_call.1']
    #allocation4 [shape = 's32[1]{0}', space=sflag, size = 0x4, scoped, tag = 'scoped memory for tpu_custom_call.1']
    #allocation5 [shape = 'u8[4096]{0}', space=vmem, size = 0x1000, scoped, tag = 'output window, operand 0, single buffered']
    %6 = vsyncpa [#allocation3], 0
    %7 = vsyncpa [#allocation4], 0
    // Predicated region
    $region2: #{tpu_custom_call.1} parent=1 // pred_check
      _
    $region3: #{tpu_custom_call.1} parent=1 // pred_check_branch
      %9 = sbr.rel (0) target = $region5
    $region4: #{tpu_custom_call.1} parent=1 // pred_region
      %s11 = ssub.s32 128, 128
      %12 = vsyncadd [#allocation3], %s11
      %s14 = sshll.u32 [#allocation2], 4
      %s15 = int_to_ptr.vmem [resolvable:$true] %s14
      %17 = dma.hbm_to_vmem [thread:$0]  %s0, 128, %s15, [#allocation3]
    $region5: #{tpu_custom_call.1} parent=1 // pred_fallthru
      _
    // Predicated region
    $region6: #{tpu_custom_call.1} parent=1 // pred_check
      _
    $region7: #{tpu_custom_call.1} parent=1 // pred_check_branch
      %19 = sbr.rel (0) target = $region9
    $region8: #{tpu_custom_call.1} parent=1 // pred_region
      %20 = dma.done [#allocation3], 128
    $region9: #{tpu_custom_call.1} parent=1 // pred_fallthru
      _
    %v21 = vld [vmem:[#allocation2] sm:$0xff]
    %22 = vst [vmem:[#allocation5] sm:$0xff] %v21
    // Predicated region
    $region10: #{tpu_custom_call.1} parent=1 // pred_check
      _
    $region11: #{tpu_custom_call.1} parent=1 // pred_check_branch
      %24 = sbr.rel (0) target = $region13
    $region12: #{tpu_custom_call.1} parent=1 // pred_region
      %s26 = ssub.s32 128, 128
      %27 = vsyncadd [#allocation4], %s26
      %s29 = sshll.u32 [#allocation5], 4
      %s30 = int_to_ptr.vmem [resolvable:$true] %s29
      %32 = dma.vmem_to_hbm [thread:$0]  %s30, 128, %s1, [#allocation4]
    $region13: #{tpu_custom_call.1} parent=1 // pred_fallthru
      _
    // Predicated region
    $region14: #{tpu_custom_call.1} parent=1 // pred_check
      _
    $region15: #{tpu_custom_call.1} parent=1 // pred_check_branch
      %34 = sbr.rel (0) target = $region17
    $region16: #{tpu_custom_call.1} parent=1 // pred_region
      %35 = dma.done [#allocation4], 128
    $region17: #{tpu_custom_call.1} parent=1 // pred_fallthru
      _
    %36 = vsyncpa [#allocation3], 1
    %37 = vsyncpa [#allocation4], 1

</llo_original>
